<compile_context>
chip_gen: v5e
topology: v5e:2x2
jax: 0.10.0
libtpu: 0.0.40
codegen_flags: <defaults>
</compile_context>

<pallas_src>
import functools

import jax
import jax.numpy as jnp
from jax.experimental import pallas as pl
from jax.experimental.pallas import tpu as pltpu


def _round_up(x, m):
    return (x + m - 1) // m * m


def _cdiv(a, b):
    return (a + b - 1) // b


def _patch_embed_kernel(p_ref, w_ref, b_ref, o_ref):
    # p_ref: [TM, Kp] bf16 patch tile (streams over the M grid axis)
    # w_ref: [Kp, Ep] bf16 flattened conv weight (VMEM-resident, constant block)
    # b_ref: [1, Ep]  f32 bias (VMEM-resident)
    # o_ref: [TM, Ep] output tile (f32 or bf16)
    acc = jnp.dot(p_ref[...], w_ref[...], preferred_element_type=jnp.float32)
    o_ref[...] = (acc + b_ref[...]).astype(o_ref.dtype)


def _buffer_bytes(tm, Kp, Ep, in_itemsize, out_itemsize):
    # Double-buffered patch tile + weight + bias (sublane-padded) + output tile.
    return (2 * tm * Kp * in_itemsize
            + 2 * Kp * Ep * in_itemsize
            + 2 * 8 * Ep * 4
            + 2 * tm * Ep * out_itemsize)


def _pick_tm(M, Kp, Ep, in_itemsize, out_itemsize, tm_max, vmem_budget):
    """Pick the M tile: big (amortize ~0.35us/step), multiple of 256 for the
    256x256 MXU, >= 2 grid steps when there is enough work (both v7x TCs),
    and fitting the VMEM budget."""
    Mr = _round_up(M, 8)
    if Mr <= 512:
        return Mr  # small problem: single tile, whole thing in one shot
    tm = min(tm_max, _round_up(_cdiv(Mr, 2), 256))  # guarantees grid_m >= 2
    tm = max(tm, 256)
    while tm > 256 and _buffer_bytes(tm, Kp, Ep, in_itemsize, out_itemsize) > vmem_budget:
        tm -= 256
    return tm


def patch_embed_matmul(patches, w_flat, bias, *, tm=None, tm_max=1024,
                       compute_dtype=jnp.bfloat16, out_dtype=jnp.float32):
    """patches: [M, K], w_flat: [K, E], bias: [E] -> [M, E] in out_dtype."""
    M, K = patches.shape
    K2, E = w_flat.shape
    assert K == K2

    # Lane-dense padding: contraction dim and output feature dim -> x128.
    Kp = _round_up(K, 128)
    Ep = _round_up(E, 128)

    in_itemsize = jnp.dtype(compute_dtype).itemsize
    out_itemsize = jnp.dtype(out_dtype).itemsize

    if tm is None:
        # 28 MiB budget keeps us inside the 32 MiB scoped-VMEM default on
        # v6e/v7x (v5e's 16 MiB default is raised via vmem_limit_bytes below,
        # well under its 128 MiB physical VMEM).
        tm = _pick_tm(M, Kp, Ep, in_itemsize, out_itemsize, tm_max,
                      vmem_budget=28 << 20)
    tm = max(8, min(_round_up(tm, 8), _round_up(M, 8)))
    grid_m = _cdiv(M, tm)

    if Kp != K:
        patches = jnp.pad(patches, ((0, 0), (0, Kp - K)))
        w_flat = jnp.pad(w_flat, ((0, Kp - K), (0, 0)))
    if Ep != E:
        w_flat = jnp.pad(w_flat, ((0, 0), (0, Ep - E)))
        bias = jnp.pad(bias, ((0, Ep - E),))

    # bf16 inputs for MXU peak + halved HBM bytes; accumulate in f32.
    # (The pad/cast fuse with the upstream im2col transpose into one pass.)
    patches = patches.astype(compute_dtype)
    w_flat = w_flat.astype(compute_dtype)
    bias2d = bias.reshape(1, Ep).astype(jnp.float32)

    # Explicit scoped-VMEM limit sized to the actual buffers (+ headroom).
    vmem_limit = _buffer_bytes(tm, Kp, Ep, in_itemsize, out_itemsize) + (2 << 20)
    vmem_limit = int(min(max(vmem_limit, 16 << 20), 64 << 20))

    cost = pl.CostEstimate(
        flops=2 * M * Kp * Ep,
        transcendentals=0,
        bytes_accessed=(M * Kp + Kp * Ep) * in_itemsize
        + Ep * 4 + M * Ep * out_itemsize,
    )

    out = pl.pallas_call(
        _patch_embed_kernel,
        out_shape=jax.ShapeDtypeStruct((M, Ep), out_dtype),
        grid_spec=pl.GridSpec(
            grid=(grid_m,),
            in_specs=[
                # Patches stream: a new [tm, Kp] tile per grid step.
                pl.BlockSpec((tm, Kp), lambda i: (i, 0)),
                # Weight / bias: constant block index -> DMA'd once, resident.
                pl.BlockSpec((Kp, Ep), lambda i: (0, 0)),
                pl.BlockSpec((1, Ep), lambda i: (0, 0)),
            ],
            out_specs=pl.BlockSpec((tm, Ep), lambda i: (i, 0)),
        ),
        compiler_params=pltpu.CompilerParams(
            # Independent M tiles: shard across both TensorCores on v7x.
            dimension_semantics=("parallel",),
            vmem_limit_bytes=vmem_limit,
        ),
        cost_estimate=cost,
    )(patches, w_flat, bias2d)

    if Ep != E:
        # Only triggers when E is not a multiple of 128 (never for real ViT
        # dims like 768/1024/1152); the padded form could be kept downstream.
        out = out[:, :E]
    return out


def patch_embed_forward(x, weight, bias, patch_size, tubelet_size, *,
                        tm=None, compute_dtype=jnp.bfloat16,
                        out_dtype=jnp.float32):
    """x: [B, C, T, H, W]; weight: [E, C, tub, p, p]; bias: [E] -> [B, N, E]."""
    B, C, T, H, W = x.shape
    E = weight.shape[0]
    p = patch_size
    tub = tubelet_size
    Tp, Hp, Wp = T // tub, H // p, W // p
    K = C * tub * p * p

    # Glue: non-overlapping patch extraction (== strided Conv3d im2col).
    # Materialized once (bf16) so the kernel's streamed [tm, Kp] input DMA is
    # fully contiguous instead of a p-element strided gather fused into the
    # tile DMA.  If the producer can supply channels-last [B,T,H,W,C] this
    # becomes a pure reshape with no transpose pass at all.
    xr = x.reshape(B, C, Tp, tub, Hp, p, Wp, p)
    xr = jnp.transpose(xr, (0, 2, 4, 6, 1, 3, 5, 7))
    patches = xr.reshape(B * Tp * Hp * Wp, K)

    # Conv weight [E, C, tub, p, p] -> [K, E] (same (C, tub, p, p) ordering).
    w_flat = weight.reshape(E, K).T

    out = patch_embed_matmul(patches, w_flat, bias, tm=tm,
                             compute_dtype=compute_dtype,
                             out_dtype=out_dtype)  # [B*N, E]
    return out.reshape(B, Tp * Hp * Wp, E)


if __name__ == "__main__":
    # Small shapes consistent with PatchEmbed semantics.
    B, C = 2, 4
    img_size = 16
    patch_size = 4
    num_frames = 4
    tubelet_size = 2
    embed_dim = 32

    T, H, W = num_frames, img_size, img_size
    E = embed_dim
    K = C * tubelet_size * patch_size * patch_size

    key = jax.random.PRNGKey(0)
    kx, kw, kb = jax.random.split(key, 3)
    x = jax.random.normal(kx, (B, C, T, H, W), dtype=jnp.float32)
    # Deterministic synthetic Conv3d params: weight [E, C, tub, p, p], bias [E].
    weight = jax.random.normal(
        kw, (E, C, tubelet_size, patch_size, patch_size),
        dtype=jnp.float32) * 0.02
    bias = jax.random.normal(kb, (E,), dtype=jnp.float32) * 0.02

    # Reference: same math in plain JAX/f32 (strided Conv3d == patch matmul).
    Tp, Hp, Wp = T // tubelet_size, H // patch_size, W // patch_size
    xr = x.reshape(B, C, Tp, tubelet_size, Hp, patch_size, Wp, patch_size)
    xr = jnp.transpose(xr, (0, 2, 4, 6, 1, 3, 5, 7)).reshape(B * Tp * Hp * Wp, K)
    ref = (xr @ weight.reshape(E, K).T + bias).reshape(B, Tp * Hp * Wp, E)

    # 1) Default path: bf16 compute, f32 output (PyTorch-comparable).
    fwd = jax.jit(functools.partial(
        patch_embed_forward, patch_size=patch_size, tubelet_size=tubelet_size))
    out = jax.block_until_ready(fwd(x, weight, bias))
    assert out.shape == (B, Tp * Hp * Wp, E), out.shape
    max_err = float(jnp.max(jnp.abs(out - ref)))
    assert jnp.allclose(out, ref, atol=2e-2, rtol=2e-2), f"mismatch: {max_err}"

    # 2) Ragged last M tile (M=64, tm=40 -> grid of 2 with a masked partial
    #    tile) to exercise the partial-block path.
    fwd_ragged = jax.jit(functools.partial(
        patch_embed_forward, patch_size=patch_size, tubelet_size=tubelet_size,
        tm=40))
    out_r = jax.block_until_ready(fwd_ragged(x, weight, bias))
    max_err_r = float(jnp.max(jnp.abs(out_r - ref)))
    assert jnp.allclose(out_r, ref, atol=2e-2, rtol=2e-2), f"ragged: {max_err_r}"

    # 3) f32 compute path for full PyTorch parity (exposed for users who need it).
    fwd_f32 = jax.jit(functools.partial(
        patch_embed_forward, patch_size=patch_size, tubelet_size=tubelet_size,
        compute_dtype=jnp.float32))
    out_f32 = jax.block_until_ready(fwd_f32(x, weight, bias))
    max_err_f = float(jnp.max(jnp.abs(out_f32 - ref)))
    assert jnp.allclose(out_f32, ref, atol=1e-4, rtol=1e-4), f"f32: {max_err_f}"

    # 4) bf16 output (halves HBM writeback on mem-bound v6e); looser tolerance.
    fwd_bf16 = jax.jit(functools.partial(
        patch_embed_forward, patch_size=patch_size, tubelet_size=tubelet_size,
        out_dtype=jnp.bfloat16))
    out_bf = jax.block_until_ready(fwd_bf16(x, weight, bias))
    assert out_bf.dtype == jnp.bfloat16
    assert jnp.allclose(out_bf.astype(jnp.float32), ref, atol=6e-2, rtol=6e-2)

    print("KERNEL_OK")
</pallas_src>

<mosaic_0001>
module attributes {stable_mosaic.version = 11 : i64} {
  func.func @_patch_embed_kernel(%arg0: i32, %arg1: memref<64x128xbf16, #tpu.memory_space<vmem>>, %arg2: memref<128x128xbf16, #tpu.memory_space<vmem>>, %arg3: memref<1x128xf32, #tpu.memory_space<vmem>>, %arg4: memref<64x128xf32, #tpu.memory_space<vmem>>) attributes {dimension_semantics = [#tpu.dimension_semantics<parallel>], iteration_bounds = array<i64: 1>, scalar_prefetch = 0 : i64, scratch_operands = 0 : i64, tpu.core_type = #tpu.core_type<tc>, window_params = [{transform_indices = @transform_0, window_bounds = array<i64: 64, 128>}, {pipeline_mode = #tpu.pipeline_mode<synchronous>, transform_indices = @transform_1, window_bounds = array<i64: 128, 128>}, {pipeline_mode = #tpu.pipeline_mode<synchronous>, transform_indices = @transform_2, window_bounds = array<i64: 1, 128>}, {transform_indices = @transform_3, window_bounds = array<i64: 64, 128>}]} {
    %c0 = arith.constant 0 : index
    %c0_0 = arith.constant 0 : index
    %0 = vector.load %arg1[%c0, %c0_0] : memref<64x128xbf16, #tpu.memory_space<vmem>>, vector<64x128xbf16>
    %c0_1 = arith.constant 0 : index
    %c0_2 = arith.constant 0 : index
    %1 = vector.load %arg2[%c0_1, %c0_2] : memref<128x128xbf16, #tpu.memory_space<vmem>>, vector<128x128xbf16>
    %cst = arith.constant dense<0.000000e+00> : vector<64x128xf32>
    %2 = tpu.matmul %0, %1, %cst {dimension_numbers = #tpu.dot_dimension_numbers<[1], [0], [0], [1], [0, 0, 1, 1], [], []>} : vector<64x128xbf16>, vector<128x128xbf16>, vector<64x128xf32> -> vector<64x128xf32>
    %c0_3 = arith.constant 0 : index
    %c0_4 = arith.constant 0 : index
    %3 = vector.load %arg3[%c0_3, %c0_4] : memref<1x128xf32, #tpu.memory_space<vmem>>, vector<1x128xf32>
    %4 = vector.broadcast %3 : vector<1x128xf32> to vector<64x128xf32>
    %5 = arith.addf %2, %4 : vector<64x128xf32>
    %c0_5 = arith.constant 0 : index
    %c0_6 = arith.constant 0 : index
    %6 = vector.load %arg4[%c0_5, %c0_6] : memref<64x128xf32, #tpu.memory_space<vmem>>, vector<64x128xf32>
    tpu.vector_store %arg4[%c0_5, %c0_6], %5 {strides = array<i32>} : memref<64x128xf32, #tpu.memory_space<vmem>>, vector<64x128xf32>,
    return
  }
  func.func @transform_0(%arg0: i32) -> (i32, i32) {
    %c0_i32 = arith.constant 0 : i32
    %c0_i32_0 = arith.constant 0 : i32
    return %arg0, %c0_i32 : i32, i32
  }
  func.func @transform_1(%arg0: i32) -> (i32, i32) {
    %c0_i32 = arith.constant 0 : i32
    %c0_i32_0 = arith.constant 0 : i32
    %c0_i32_1 = arith.constant 0 : i32
    return %c0_i32, %c0_i32_0 : i32, i32
  }
  func.func @transform_2(%arg0: i32) -> (i32, i32) {
    %c0_i32 = arith.constant 0 : i32
    %c0_i32_0 = arith.constant 0 : i32
    %c0_i32_1 = arith.constant 0 : i32
    return %c0_i32, %c0_i32_0 : i32, i32
  }
  func.func @transform_3(%arg0: i32) -> (i32, i32) {
    %c0_i32 = arith.constant 0 : i32
    %c0_i32_0 = arith.constant 0 : i32
    return %arg0, %c0_i32 : i32, i32
  }
}

</mosaic_0001>

<llo_original>
// kernel: patch_embed_forward.1
$region0: #{patch_embed_forward.1}
  #allocation0 [shape = 'u32[]', space=smem, size = 0x4, offset = 0x4, fixed_abs, tag = 'smem constant byte address 0x4 - core index']
  #allocation1 [shape = 'u32[72,128]{1,0:T(1,128)}', space=vmem, size = 0x9000, scoped, tag = 'internal scratch']
  %s0 = inlined_call_operand.vmem [shape: bf16[64,128], index: 0, kind: input, shape index: {}]
  %s1 = inlined_call_operand.vmem [shape: bf16[128,128], index: 1, kind: input, shape index: {}]
  %s2 = inlined_call_operand.vmem [shape: f32[1,128], index: 2, kind: input, shape index: {}]
  %s3 = inlined_call_operand.hbm [shape: f32[64,128], index: 3, kind: output, shape index: {}]
  %s4 = sld [smem:[#allocation0]]
  $region22: #{patch_embed_forward.1} parent=0
    _
  %s6 = ssub.s32 1, %s4
  %s7 = scalar_select 0, %s6, %s4
  $region1: #{patch_embed_forward.1} parent=0
    #allocation2 [shape = 'u8[32768]{0}', space=vmem, size = 0x8000, scoped, tag = 'output window, operand 0, single buffered']
    #allocation3 [shape = 's32[1]{0}', space=sflag, size = 0x4, scoped, tag = 'scoped memory for patch_embed_forward.1']
    %8 = vsyncpa [#allocation3], 0
    // Predicated region
    $region2: #{patch_embed_forward.1} parent=1 // pred_check
      _
    $region3: #{patch_embed_forward.1} parent=1 // pred_check_branch
      %10 = sbr.rel (0) target = $region5
    $region4: #{patch_embed_forward.1} parent=1 // pred_region
      _
    $region5: #{patch_embed_forward.1} parent=1 // pred_fallthru
      _
    // Predicated region
    $region6: #{patch_embed_forward.1} parent=1 // pred_check
      _
    $region7: #{patch_embed_forward.1} parent=1 // pred_check_branch
      %12 = sbr.rel (0) target = $region9
    $region8: #{patch_embed_forward.1} parent=1 // pred_region
      _
    $region9: #{patch_embed_forward.1} parent=1 // pred_fallthru
      _
    // Predicated region
    $region10: #{patch_embed_forward.1} parent=1 // pred_check
      _
    $region11: #{patch_embed_forward.1} parent=1 // pred_check_branch
      %14 = sbr.rel (0) target = $region13
    $region12: #{patch_embed_forward.1} parent=1 // pred_region
      _
    $region13: #{patch_embed_forward.1} parent=1 // pred_fallthru
      _
    %v15 = vld [vmem:[%s0] sm:$0xf]
    %v16 = vld [vmem:[%s0 + $0x4] sm:$0xf]
    %v17 = vld [vmem:[%s0 + $0x8] sm:$0xf]
    %v18 = vld [vmem:[%s0 + $0xc] sm:$0xf]
    %v19 = vld [vmem:[%s0 + $0x10] sm:$0xf]
    %v20 = vld [vmem:[%s0 + $0x14] sm:$0xf]
    %v21 = vld [vmem:[%s0 + $0x18] sm:$0xf]
    %v22 = vld [vmem:[%s0 + $0x1c] sm:$0xf]
    %v23 = vld [vmem:[%s1] sm:$0xf]
    %v24 = vld [vmem:[%s1 + $0x4] sm:$0xf]
    %v25 = vld [vmem:[%s1 + $0x8] sm:$0xf]
    %v26 = vld [vmem:[%s1 + $0xc] sm:$0xf]
    %v27 = vld [vmem:[%s1 + $0x10] sm:$0xf]
    %v28 = vld [vmem:[%s1 + $0x14] sm:$0xf]
    %v29 = vld [vmem:[%s1 + $0x18] sm:$0xf]
    %v30 = vld [vmem:[%s1 + $0x1c] sm:$0xf]
    %v31 = vld [vmem:[%s1 + $0x20] sm:$0xf]
    %v32 = vld [vmem:[%s1 + $0x24] sm:$0xf]
    %v33 = vld [vmem:[%s1 + $0x28] sm:$0xf]
    %v34 = vld [vmem:[%s1 + $0x2c] sm:$0xf]
    %v35 = vld [vmem:[%s1 + $0x30] sm:$0xf]
    %v36 = vld [vmem:[%s1 + $0x34] sm:$0xf]
    %v37 = vld [vmem:[%s1 + $0x38] sm:$0xf]
    %v38 = vld [vmem:[%s1 + $0x3c] sm:$0xf]
    %v39 = vld [vmem:[%s2] sm:$0x1]
    %v41 = vperm.slane %v39, 0
    %v51 = vunpack.c.l.b16 %v15
    %v52 = vunpack.c.l.b16 %v16
    %v53 = vunpack.c.l.b16 %v17
    %v54 = vunpack.c.l.b16 %v18
    %v55 = vunpack.c.l.b16 %v19
    %v56 = vunpack.c.l.b16 %v20
    %v57 = vunpack.c.l.b16 %v21
    %v58 = vunpack.c.l.b16 %v22
    %v59 = vpack.c.b16 %v52, %v51
    %v60 = vpack.c.b16 %v54, %v53
    %v61 = vpack.c.b16 %v56, %v55
    %v62 = vpack.c.b16 %v58, %v57
    %v83 = vunpack.c.l.b16 %v23
    %v84 = vunpack.c.l.b16 %v24
    %v85 = vunpack.c.l.b16 %v25
    %v86 = vunpack.c.l.b16 %v26
    %v87 = vunpack.c.l.b16 %v27
    %v88 = vunpack.c.l.b16 %v28
    %v89 = vunpack.c.l.b16 %v29
    %v90 = vunpack.c.l.b16 %v30
    %v91 = vunpack.c.l.b16 %v31
    %v92 = vunpack.c.l.b16 %v32
    %v93 = vunpack.c.l.b16 %v33
    %v94 = vunpack.c.l.b16 %v34
    %v95 = vunpack.c.l.b16 %v35
    %v96 = vunpack.c.l.b16 %v36
    %v97 = vunpack.c.l.b16 %v37
    %v98 = vunpack.c.l.b16 %v38
    %v99 = vpack.c.b16 %v84, %v83
    %v100 = vpack.c.b16 %v86, %v85
    %v101 = vpack.c.b16 %v88, %v87
    %v102 = vpack.c.b16 %v90, %v89
    %v103 = vpack.c.b16 %v92, %v91
    %v104 = vpack.c.b16 %v94, %v93
    %v105 = vpack.c.b16 %v96, %v95
    %v106 = vpack.c.b16 %v98, %v97
    %115 = vmatpush.bf16.msra.mxu0 %v106
    %116 = vmatpush.bf16.msra.mxu0 %v105
    %117 = vmatpush.bf16.msra.mxu0 %v104
    %118 = vmatpush.bf16.msra.mxu0 %v103
    %119 = vmatpush.bf16.msra.mxu0 %v102
    %120 = vmatpush.bf16.msra.mxu0 %v101
    %121 = vmatpush.bf16.msra.mxu0 %v100
    %122 = vmatpush.bf16.msra.mxu0 %v99
    %123 = vmatmul.bf16.gmra.mxu0 %v59
    %v124 = vpop.f32.mrf.mxu0
    %v125 = vadd.f32 %v41, %v124
    %v126 = vpop.f32.mrf.mxu0
    %v127 = vadd.f32 %v41, %v126
    %128 = vmatmul.bf16.gmra.mxu0 %v60
    %v129 = vpop.f32.mrf.mxu0
    %v130 = vadd.f32 %v41, %v129
    %v131 = vpop.f32.mrf.mxu0
    %v132 = vadd.f32 %v41, %v131
    %133 = vmatmul.bf16.gmra.mxu0 %v61
    %v134 = vpop.f32.mrf.mxu0
    %v135 = vadd.f32 %v41, %v134
    %v136 = vpop.f32.mrf.mxu0
    %v137 = vadd.f32 %v41, %v136
    %138 = vmatmul.bf16.gmra.mxu0 %v62
    %v139 = vpop.f32.mrf.mxu0
    %v140 = vadd.f32 %v41, %v139
    %v141 = vpop.f32.mrf.mxu0
    %v142 = vadd.f32 %v41, %v141
    %143 = vdwg.mxu0
    %144 = vst [vmem:[#allocation2] sm:$0xff] %v125
    %145 = vst [vmem:[#allocation2 + $0x8] sm:$0xff] %v127
    %146 = vst [vmem:[#allocation2 + $0x10] sm:$0xff] %v130
    %147 = vst [vmem:[#allocation2 + $0x18] sm:$0xff] %v132
    %148 = vst [vmem:[#allocation2 + $0x20] sm:$0xff] %v135
    %149 = vst [vmem:[#allocation2 + $0x28] sm:$0xff] %v137
    %150 = vst [vmem:[#allocation2 + $0x30] sm:$0xff] %v140
    %151 = vst [vmem:[#allocation2 + $0x38] sm:$0xff] %v142
    // Predicated region
    $region14: #{patch_embed_forward.1} parent=1 // pred_check
      _
    $region15: #{patch_embed_forward.1} parent=1 // pred_check_branch
      %153 = sbr.rel (0) target = $region17
    $region16: #{patch_embed_forward.1} parent=1 // pred_region
      %155 = vsyncadd [#allocation3], 0
      %s156 = sshll.u32 [#allocation2], 4
      %s157 = int_to_ptr.vmem [resolvable:$true] %s156
      %s158 = sshll.u32 %s3, 4
      %s159 = int_to_ptr.hbm [resolvable:$true] %s158
      %164 = dma.vmem_to_hbm [thread:$0]  %s157, 1024, %s159, [#allocation3], 128, 128, 8
    $region17: #{patch_embed_forward.1} parent=1 // pred_fallthru
      _
    // Predicated region
    $region18: #{patch_embed_forward.1} parent=1 // pred_check
      _
    $region19: #{patch_embed_forward.1} parent=1 // pred_check_branch
      %166 = sbr.rel (0) target = $region21
    $region20: #{patch_embed_forward.1} parent=1 // pred_region
      %168 = dma.done [#allocation3], 1024
    $region21: #{patch_embed_forward.1} parent=1 // pred_fallthru
      _
    %169 = vsyncpa [#allocation3], 1

</llo_original>
